<compile_context>
chip_gen: v7x
topology: tpu7x:2x2x1
jax: 0.10.0
libtpu: 0.0.40
codegen_flags: <defaults>
</compile_context>

<pallas_src>
import math

import jax
import jax.numpy as jnp
from jax.experimental import pallas as pl
from jax.experimental.pallas import tpu as pltpu


def _complex_relu_kernel(r_ref, i_ref, or_ref, oi_ref):
    # Pure VPU elementwise work; dtypes of in/out match, no cast needed.
    or_ref[...] = jnp.maximum(r_ref[...], 0)
    oi_ref[...] = jnp.maximum(i_ref[...], 0)


def _round_up(x, m):
    return ((x + m - 1) // m) * m


def complex_relu(input_r, input_i, *,
                 target_tile_bytes=4 << 20,     # ~4 MiB per operand tile
                 vmem_limit_bytes=48 << 20,     # fits v5e/v6e/v7x
                 min_split_bytes=1 << 20,       # only force >1 step when amortized
                 donate_inputs=False):
    assert input_r.shape == input_i.shape
    assert input_r.dtype == input_i.dtype
    orig_shape = input_r.shape
    dtype = input_r.dtype
    itemsize = jnp.dtype(dtype).itemsize
    total = int(math.prod(orig_shape))

    # Sublane packing: 8 for 32-bit dtypes, 16 for bf16, 32 for 8-bit.
    sublane = max(8, 32 // itemsize)

    # ---- lane-dense column count (multiple of 128, up to 512) ----
    candidates = (512, 256, 128)
    cols = None
    for c in candidates:            # prefer: divides total AND gives >= sublane rows
        if total % c == 0 and total // c >= sublane:
            cols = c
            break
    if cols is None:
        for c in candidates:        # any divisor -> no tail at all
            if total >= c and total % c == 0:
                cols = c
                break
    if cols is None:
        for c in candidates:        # largest that still leaves a non-empty bulk
            if c <= total:
                cols = c
                break
    if cols is None:
        # Fewer than 128 elements: a kernel launch is pure overhead.
        return jnp.maximum(input_r, 0), jnp.maximum(input_i, 0)

    flat_r = input_r.reshape(-1)
    flat_i = input_i.reshape(-1)

    bulk = (total // cols) * cols
    tail = total - bulk
    rows = bulk // cols

    # ---- tile rows ----
    if rows < sublane:
        # Full-extent block (legal: equals the array dims).
        tile_rows = rows
    else:
        max_tile_rows = max(
            sublane, (target_tile_bytes // (cols * itemsize)) // sublane * sublane)
        nsteps = pl.cdiv(rows, max_tile_rows)
        # Give v7x's 2nd TensorCore work only when the extra step is amortized.
        if nsteps == 1 and rows * cols * itemsize >= min_split_bytes:
            nsteps = 2
        # Keep step counts even so the parallel axis splits 50/50 across TCs.
        if nsteps > 1 and nsteps % 2 == 1:
            nsteps += 1
        tile_rows = max(sublane, _round_up(pl.cdiv(rows, nsteps), sublane))
    grid = (pl.cdiv(rows, tile_rows),)   # ragged last block handled by Pallas

    if tail == 0:
        r2 = flat_r.reshape(rows, cols)          # free bitcast reshape
        i2 = flat_i.reshape(rows, cols)
    else:
        r2 = flat_r[:bulk].reshape(rows, cols)   # static prefix slice
        i2 = flat_i[:bulk].reshape(rows, cols)

    blk = pl.BlockSpec((tile_rows, cols), lambda i: (i, 0))

    cost = pl.CostEstimate(
        flops=2 * rows * cols,                     # one max per element, 2 tensors
        transcendentals=0,
        bytes_accessed=4 * rows * cols * itemsize  # 2 reads + 2 writes
    )

    out_r2, out_i2 = pl.pallas_call(
        _complex_relu_kernel,
        out_shape=(
            jax.ShapeDtypeStruct((rows, cols), dtype),
            jax.ShapeDtypeStruct((rows, cols), dtype),
        ),
        grid_spec=pltpu.PrefetchScalarGridSpec(
            num_scalar_prefetch=0,
            grid=grid,
            in_specs=[blk, blk],
            out_specs=[blk, blk],
        ),
        compiler_params=pltpu.CompilerParams(
            dimension_semantics=("parallel",),
            vmem_limit_bytes=vmem_limit_bytes,
        ),
        cost_estimate=cost,
        input_output_aliases=({0: 0, 1: 1} if donate_inputs else {}),
    )(r2, i2)

    if tail == 0:
        return out_r2.reshape(orig_shape), out_i2.reshape(orig_shape)

    # Tiny (< cols) tail: plain VPU work in the wrapper, then stitch.
    tail_r = jnp.maximum(flat_r[bulk:], 0)
    tail_i = jnp.maximum(flat_i[bulk:], 0)
    out_r = jnp.concatenate([out_r2.reshape(-1), tail_r]).reshape(orig_shape)
    out_i = jnp.concatenate([out_i2.reshape(-1), tail_i]).reshape(orig_shape)
    return out_r, out_i


if __name__ == "__main__":
    key = jax.random.PRNGKey(0)
    kr, ki, kr2, ki2 = jax.random.split(key, 4)

    # Small NCHW feature-map shape consistent with the conv-net module.
    x_r = jax.random.normal(kr, (2, 4, 16, 16), dtype=jnp.float32)
    x_i = jax.random.normal(ki, (2, 4, 16, 16), dtype=jnp.float32)

    y_r, y_i = complex_relu(x_r, x_i)
    jax.block_until_ready((y_r, y_i))

    ref_r = jnp.maximum(x_r, 0.0)
    ref_i = jnp.maximum(x_i, 0.0)
    assert y_r.shape == x_r.shape and y_i.shape == x_i.shape
    assert jnp.allclose(y_r, ref_r) and jnp.allclose(y_i, ref_i)

    # Ragged shape (odd factors) exercises the bulk+tail path (no pad, no slice
    # of padded output).
    z_r = jax.random.normal(kr2, (3, 5, 7, 11), dtype=jnp.float32)
    z_i = jax.random.normal(ki2, (3, 5, 7, 11), dtype=jnp.float32)
    w_r, w_i = complex_relu(z_r, z_i)
    jax.block_until_ready((w_r, w_i))
    assert jnp.allclose(w_r, jnp.maximum(z_r, 0.0))
    assert jnp.allclose(w_i, jnp.maximum(z_i, 0.0))

    print("KERNEL_OK")
</pallas_src>

<mosaic_0001>
module attributes {stable_mosaic.version = 11 : i64} {
  func.func @_complex_relu_kernel(%arg0: i32, %arg1: memref<8x256xf32, #tpu.memory_space<vmem>>, %arg2: memref<8x256xf32, #tpu.memory_space<vmem>>, %arg3: memref<8x256xf32, #tpu.memory_space<vmem>>, %arg4: memref<8x256xf32, #tpu.memory_space<vmem>>) attributes {dimension_semantics = [#tpu.dimension_semantics<parallel>], iteration_bounds = array<i64: 1>, scalar_prefetch = 0 : i64, scratch_operands = 0 : i64, tpu.core_type = #tpu.core_type<tc>, window_params = [{transform_indices = @transform_0, window_bounds = array<i64: 8, 256>}, {transform_indices = @transform_1, window_bounds = array<i64: 8, 256>}, {transform_indices = @transform_2, window_bounds = array<i64: 8, 256>}, {transform_indices = @transform_3, window_bounds = array<i64: 8, 256>}]} {
    %c0 = arith.constant 0 : index
    %c0_0 = arith.constant 0 : index
    %0 = vector.load %arg1[%c0, %c0_0] : memref<8x256xf32, #tpu.memory_space<vmem>>, vector<8x256xf32>
    %cst = arith.constant 0.000000e+00 : f32
    %1 = vector.broadcast %cst : f32 to vector<8x256xf32>
    %2 = arith.maximumf %0, %1 : vector<8x256xf32>
    %c0_1 = arith.constant 0 : index
    %c0_2 = arith.constant 0 : index
    %3 = vector.load %arg3[%c0_1, %c0_2] : memref<8x256xf32, #tpu.memory_space<vmem>>, vector<8x256xf32>
    tpu.vector_store %arg3[%c0_1, %c0_2], %2 {strides = array<i32>} : memref<8x256xf32, #tpu.memory_space<vmem>>, vector<8x256xf32>,
    %c0_3 = arith.constant 0 : index
    %c0_4 = arith.constant 0 : index
    %4 = vector.load %arg2[%c0_3, %c0_4] : memref<8x256xf32, #tpu.memory_space<vmem>>, vector<8x256xf32>
    %cst_5 = arith.constant 0.000000e+00 : f32
    %5 = vector.broadcast %cst_5 : f32 to vector<8x256xf32>
    %6 = arith.maximumf %4, %5 : vector<8x256xf32>
    %c0_6 = arith.constant 0 : index
    %c0_7 = arith.constant 0 : index
    %7 = vector.load %arg4[%c0_6, %c0_7] : memref<8x256xf32, #tpu.memory_space<vmem>>, vector<8x256xf32>
    tpu.vector_store %arg4[%c0_6, %c0_7], %6 {strides = array<i32>} : memref<8x256xf32, #tpu.memory_space<vmem>>, vector<8x256xf32>,
    return
  }
  func.func @transform_0(%arg0: i32) -> (i32, i32) {
    %c0_i32 = arith.constant 0 : i32
    %c0_i32_0 = arith.constant 0 : i32
    return %arg0, %c0_i32 : i32, i32
  }
  func.func @transform_1(%arg0: i32) -> (i32, i32) {
    %c0_i32 = arith.constant 0 : i32
    %c0_i32_0 = arith.constant 0 : i32
    return %arg0, %c0_i32 : i32, i32
  }
  func.func @transform_2(%arg0: i32) -> (i32, i32) {
    %c0_i32 = arith.constant 0 : i32
    %c0_i32_0 = arith.constant 0 : i32
    return %arg0, %c0_i32 : i32, i32
  }
  func.func @transform_3(%arg0: i32) -> (i32, i32) {
    %c0_i32 = arith.constant 0 : i32
    %c0_i32_0 = arith.constant 0 : i32
    return %arg0, %c0_i32 : i32, i32
  }
}

</mosaic_0001>

<llo_original>
// kernel: tpu_custom_call.1
$region0: #{tpu_custom_call.1}
  #allocation0 [shape = 'u32[]', space=smem, size = 0x4, offset = 0x4, fixed_abs, tag = 'smem constant byte address 0x4 - core index']
  #allocation1 [shape = 'u32[144,128]{1,0:T(1,128)}', space=vmem, size = 0x12000, scoped, tag = 'internal scratch']
  %s0 = inlined_call_operand.hbm [shape: f32[8,256], index: 0, kind: input, shape index: {}]
  %s1 = inlined_call_operand.hbm [shape: f32[8,256], index: 1, kind: input, shape index: {}]
  %s2 = inlined_call_operand.hbm [shape: f32[8,256], index: 2, kind: output, shape index: {0}]
  %s3 = inlined_call_operand.hbm [shape: f32[8,256], index: 3, kind: output, shape index: {1}]
  %4 = xla_tuple %s2, %s3
  %s5 = sld [smem:[#allocation0]]
  $region34: #{tpu_custom_call.1} parent=0
    _
  %s7 = ssub.s32 1, %s5
  %s8 = scalar_select 0, %s7, %s5
  $region1: #{tpu_custom_call.1} parent=0
    #allocation2 [shape = 'u8[8192]{0}', space=vmem, size = 0x2000, scoped, tag = 'input window, operand 0, single buffered']
    #allocation3 [shape = 's32[1]{0}', space=sflag, size = 0x4, scoped, tag = 'scoped memory for tpu_custom_call.1']
    #allocation4 [shape = 's32[1]{0}', space=sflag, size = 0x4, scoped, tag = 'scoped memory for tpu_custom_call.1']
    #allocation5 [shape = 'u8[8192]{0}', space=vmem, size = 0x2000, scoped, tag = 'input window, operand 1, single buffered']
    #allocation6 [shape = 's32[1]{0}', space=sflag, size = 0x4, scoped, tag = 'scoped memory for tpu_custom_call.1']
    #allocation7 [shape = 'u8[8192]{0}', space=vmem, size = 0x2000, scoped, tag = 'output window, operand 0, single buffered']
    #allocation8 [shape = 'u8[8192]{0}', space=vmem, size = 0x2000, scoped, tag = 'output window, operand 1, single buffered']
    #allocation9 [shape = 's32[1]{0}', space=sflag, size = 0x4, scoped, tag = 'scoped memory for tpu_custom_call.1']
    %9 = vsyncpa [#allocation3], 0
    %10 = vsyncpa [#allocation6], 0
    %11 = vsyncpa [#allocation4], 0
    %12 = vsyncpa [#allocation9], 0
    // Predicated region
    $region2: #{tpu_custom_call.1} parent=1 // pred_check
      _
    $region3: #{tpu_custom_call.1} parent=1 // pred_check_branch
      %14 = sbr.rel (0) target = $region5
    $region4: #{tpu_custom_call.1} parent=1 // pred_region
      %s16 = ssub.s32 256, 256
      %17 = vsyncadd [#allocation3], %s16
      %s19 = sshll.u32 [#allocation2], 4
      %s20 = int_to_ptr.vmem [resolvable:$true] %s19
      %22 = dma.hbm_to_vmem [thread:$0]  %s0, 256, %s20, [#allocation3]
    $region5: #{tpu_custom_call.1} parent=1 // pred_fallthru
      _
    // Predicated region
    $region6: #{tpu_custom_call.1} parent=1 // pred_check
      _
    $region7: #{tpu_custom_call.1} parent=1 // pred_check_branch
      %24 = sbr.rel (0) target = $region9
    $region8: #{tpu_custom_call.1} parent=1 // pred_region
      %s26 = ssub.s32 256, 256
      %27 = vsyncadd [#allocation6], %s26
      %s29 = sshll.u32 [#allocation5], 4
      %s30 = int_to_ptr.vmem [resolvable:$true] %s29
      %32 = dma.hbm_to_vmem [thread:$0]  %s1, 256, %s30, [#allocation6]
    $region9: #{tpu_custom_call.1} parent=1 // pred_fallthru
      _
    // Predicated region
    $region10: #{tpu_custom_call.1} parent=1 // pred_check
      _
    $region11: #{tpu_custom_call.1} parent=1 // pred_check_branch
      %34 = sbr.rel (0) target = $region13
    $region12: #{tpu_custom_call.1} parent=1 // pred_region
      %35 = dma.done [#allocation3], 256
    $region13: #{tpu_custom_call.1} parent=1 // pred_fallthru
      _
    // Predicated region
    $region14: #{tpu_custom_call.1} parent=1 // pred_check
      _
    $region15: #{tpu_custom_call.1} parent=1 // pred_check_branch
      %37 = sbr.rel (0) target = $region17
    $region16: #{tpu_custom_call.1} parent=1 // pred_region
      %38 = dma.done [#allocation6], 256
    $region17: #{tpu_custom_call.1} parent=1 // pred_fallthru
      _
    %v39 = vld [vmem:[#allocation2] sm:$0xff]
    %v40 = vld [vmem:[#allocation2 + $0x8] sm:$0xff]
    %v41 = vmax.f32 %v39, 0.0
    %v42 = vmax.f32 %v40, 0.0
    %43 = vst [vmem:[#allocation7] sm:$0xff] %v41
    %44 = vst [vmem:[#allocation7 + $0x8] sm:$0xff] %v42
    %v45 = vld [vmem:[#allocation5] sm:$0xff]
    %v46 = vld [vmem:[#allocation5 + $0x8] sm:$0xff]
    %v47 = vmax.f32 %v45, 0.0
    %v48 = vmax.f32 %v46, 0.0
    %49 = vst [vmem:[#allocation8] sm:$0xff] %v47
    %50 = vst [vmem:[#allocation8 + $0x8] sm:$0xff] %v48
    // Predicated region
    $region18: #{tpu_custom_call.1} parent=1 // pred_check
      _
    $region19: #{tpu_custom_call.1} parent=1 // pred_check_branch
      %52 = sbr.rel (0) target = $region21
    $region20: #{tpu_custom_call.1} parent=1 // pred_region
      %s54 = ssub.s32 256, 256
      %55 = vsyncadd [#allocation4], %s54
      %s57 = sshll.u32 [#allocation7], 4
      %s58 = int_to_ptr.vmem [resolvable:$true] %s57
      %60 = dma.vmem_to_hbm [thread:$0]  %s58, 256, %s2, [#allocation4]
    $region21: #{tpu_custom_call.1} parent=1 // pred_fallthru
      _
    // Predicated region
    $region22: #{tpu_custom_call.1} parent=1 // pred_check
      _
    $region23: #{tpu_custom_call.1} parent=1 // pred_check_branch
      %62 = sbr.rel (0) target = $region25
    $region24: #{tpu_custom_call.1} parent=1 // pred_region
      %s64 = ssub.s32 256, 256
      %65 = vsyncadd [#allocation9], %s64
      %s67 = sshll.u32 [#allocation8], 4
      %s68 = int_to_ptr.vmem [resolvable:$true] %s67
      %70 = dma.vmem_to_hbm [thread:$0]  %s68, 256, %s3, [#allocation9]
    $region25: #{tpu_custom_call.1} parent=1 // pred_fallthru
      _
    // Predicated region
    $region26: #{tpu_custom_call.1} parent=1 // pred_check
      _
    $region27: #{tpu_custom_call.1} parent=1 // pred_check_branch
      %72 = sbr.rel (0) target = $region29
    $region28: #{tpu_custom_call.1} parent=1 // pred_region
      %73 = dma.done [#allocation4], 256
    $region29: #{tpu_custom_call.1} parent=1 // pred_fallthru
      _
    // Predicated region
    $region30: #{tpu_custom_call.1} parent=1 // pred_check
      _
    $region31: #{tpu_custom_call.1} parent=1 // pred_check_branch
      %75 = sbr.rel (0) target = $region33
    $region32: #{tpu_custom_call.1} parent=1 // pred_region
      %76 = dma.done [#allocation9], 256
    $region33: #{tpu_custom_call.1} parent=1 // pred_fallthru
      _
    %77 = vsyncpa [#allocation3], 1
    %78 = vsyncpa [#allocation6], 1
    %79 = vsyncpa [#allocation4], 1
    %80 = vsyncpa [#allocation9], 1

</llo_original>
